<compile_context>
chip_gen: v6e
topology: v6e:2x2x1
jax: 0.10.0
libtpu: 0.0.40
codegen_flags: <defaults>
</compile_context>

<pallas_src>
import functools

import jax
import jax.numpy as jnp
from jax import lax
from jax.experimental import pallas as pl
from jax.experimental.pallas import tpu as pltpu


def _gelu_exact(x):
    # Exact (erf) GELU, matching torch.nn.GELU() default.
    return 0.5 * x * (1.0 + lax.erf(x * 0.7071067811865476))


def _mlp_kernel(x_ref, w1_ref, b1_ref, w2_ref, b2_ref, o_ref):
    # x_ref  : (tm, C_in)       VMEM tile of the flattened tokens (native dtype)
    # w1_ref : (C_in, C_hid)    full fc1 weight (transposed vs. PyTorch), resident
    # b1_ref : (1, C_hid)
    # w2_ref : (C_hid, C_out)   full fc2 weight (transposed vs. PyTorch), resident
    # b2_ref : (1, C_out)
    # o_ref  : (tm, C_out)
    x = x_ref[...]                                     # native dtype -> MXU
    h = jnp.dot(x, w1_ref[...], preferred_element_type=jnp.float32)
    h = h + b1_ref[...].astype(jnp.float32)            # f32 epilogue
    h = _gelu_exact(h)
    # TODO(synk): dropout has p=0.0 in this module -> identity; nonzero-p
    # training dropout would use pltpu.prng_seed / pltpu.prng_random_bits.

    # Feed the second matmul in the fc2-weight dtype (bf16 in mixed precision),
    # still accumulating in f32 on the MXU.
    h = h.astype(w2_ref.dtype)
    y = jnp.dot(h, w2_ref[...], preferred_element_type=jnp.float32)
    y = y + b2_ref[...].astype(jnp.float32)

    o_ref[...] = y.astype(o_ref.dtype)


def _vmem_budget_bytes(tm, C_in, C_hid, C_out, x_itemsize, w_itemsize, o_itemsize):
    # Double-buffered activation tiles + single-buffered resident weights
    # + f32 intermediate, with headroom.
    tile_io = 2 * tm * C_in * x_itemsize + 2 * tm * C_out * o_itemsize
    weights = (C_in * C_hid + C_hid * C_out + C_hid + C_out) * w_itemsize
    interm = 2 * tm * C_hid * 4                      # f32 hidden activations
    total = int((tile_io + weights + interm) * 1.3) + (8 << 20)
    try:
        cap = int(pltpu.get_tpu_info().vmem_capacity_bytes * 0.85)
    except Exception:
        cap = 56 << 20                               # safe for v7x's 64 MiB VMEM
    return max(16 << 20, min(total, cap))


@functools.partial(jax.jit, static_argnames=("tm",))
def mlp_pallas(x, w1, b1, w2, b2, *, tm=256):
    """Fused MLP forward.

    x : [B, N, C_in]
    w1: [C_in, C_hid]   (transposed PyTorch fc1.weight)
    b1: [C_hid]
    w2: [C_hid, C_out]  (transposed PyTorch fc2.weight)
    b2: [C_out]
    returns [B, N, C_out]
    """
    assert tm % 8 == 0, "row tile must be a multiple of 8"
    B, N, C_in = x.shape
    C_hid = w1.shape[1]
    C_out = w2.shape[1]

    M = B * N
    x2 = x.reshape(M, C_in)
    b1_2 = b1.reshape(1, C_hid)
    b2_2 = b2.reshape(1, C_out)

    # Small inputs: one block covering all rows (block dim == full array dim,
    # so no (8,128) divisibility issue and no padding copy in HBM).
    tm_eff = M if M <= tm else tm
    grid = (pl.cdiv(M, tm_eff),)

    flops = 2 * M * (C_in * C_hid + C_hid * C_out)
    bytes_accessed = (
        M * C_in * x.dtype.itemsize
        + (C_in * C_hid + C_hid + C_hid * C_out + C_out) * w1.dtype.itemsize
        + M * C_out * x.dtype.itemsize
    )
    cost = pl.CostEstimate(flops=flops,
                           transcendentals=M * C_hid,
                           bytes_accessed=bytes_accessed)

    vmem_bytes = _vmem_budget_bytes(tm_eff, C_in, C_hid, C_out,
                                    x.dtype.itemsize, w1.dtype.itemsize,
                                    x.dtype.itemsize)

    out = pl.pallas_call(
        _mlp_kernel,
        out_shape=jax.ShapeDtypeStruct((M, C_out), x.dtype),
        grid_spec=pltpu.PrefetchScalarGridSpec(
            num_scalar_prefetch=0,
            grid=grid,
            in_specs=[
                pl.BlockSpec((tm_eff, C_in), lambda i: (i, 0)),   # x tile
                pl.BlockSpec((C_in, C_hid), lambda i: (0, 0),     # w1 resident
                             pipeline_mode=pl.Buffered(1)),
                pl.BlockSpec((1, C_hid), lambda i: (0, 0),        # b1 resident
                             pipeline_mode=pl.Buffered(1)),
                pl.BlockSpec((C_hid, C_out), lambda i: (0, 0),    # w2 resident
                             pipeline_mode=pl.Buffered(1)),
                pl.BlockSpec((1, C_out), lambda i: (0, 0),        # b2 resident
                             pipeline_mode=pl.Buffered(1)),
            ],
            out_specs=pl.BlockSpec((tm_eff, C_out), lambda i: (i, 0)),
        ),
        compiler_params=pltpu.CompilerParams(
            dimension_semantics=("parallel",),
            vmem_limit_bytes=vmem_bytes),
        cost_estimate=cost,
    )(x2, w1, b1_2, w2, b2_2)

    return out.reshape(B, N, C_out)


def _ref_mlp(x, w1, b1, w2, b2):
    x = x.astype(jnp.float32)
    h = jnp.dot(x, w1.astype(jnp.float32)) + b1.astype(jnp.float32)
    h = 0.5 * h * (1.0 + lax.erf(h * 0.7071067811865476))
    return jnp.dot(h, w2.astype(jnp.float32)) + b2.astype(jnp.float32)


if __name__ == "__main__":
    key = jax.random.PRNGKey(0)
    B, N = 2, 8
    in_features, hidden_features, out_features = 32, 64, 32

    k_x, k_w1, k_b1, k_w2, k_b2 = jax.random.split(key, 5)

    x = jax.random.normal(k_x, (B, N, in_features), dtype=jnp.float32)

    # Deterministic init mimicking nn.Linear (uniform(-1/sqrt(fan_in), +...)).
    lim1 = 1.0 / (in_features ** 0.5)
    lim2 = 1.0 / (hidden_features ** 0.5)
    w1 = jax.random.uniform(k_w1, (in_features, hidden_features),
                            minval=-lim1, maxval=lim1, dtype=jnp.float32)
    b1 = jax.random.uniform(k_b1, (hidden_features,),
                            minval=-lim1, maxval=lim1, dtype=jnp.float32)
    w2 = jax.random.uniform(k_w2, (hidden_features, out_features),
                            minval=-lim2, maxval=lim2, dtype=jnp.float32)
    b2 = jax.random.uniform(k_b2, (out_features,),
                            minval=-lim2, maxval=lim2, dtype=jnp.float32)

    # f32 path: must match the reference tightly.
    y = mlp_pallas(x, w1, b1, w2, b2)
    y = jax.block_until_ready(y)
    y_ref = _ref_mlp(x, w1, b1, w2, b2)
    assert y.shape == (B, N, out_features)
    assert jnp.allclose(y, y_ref, atol=1e-5, rtol=1e-5), "f32 mismatch vs reference"

    # bf16 mixed-precision path (MXU-native operands, f32 accumulation).
    xb, w1b, b1b = x.astype(jnp.bfloat16), w1.astype(jnp.bfloat16), b1.astype(jnp.bfloat16)
    w2b, b2b = w2.astype(jnp.bfloat16), b2.astype(jnp.bfloat16)
    yb = mlp_pallas(xb, w1b, b1b, w2b, b2b)
    yb = jax.block_until_ready(yb)
    yb_ref = _ref_mlp(xb, w1b, b1b, w2b, b2b)
    assert yb.shape == (B, N, out_features)
    assert bool(jnp.all(jnp.isfinite(yb.astype(jnp.float32))))
    assert jnp.allclose(yb.astype(jnp.float32), yb_ref, atol=1e-1, rtol=1e-1), \
        "bf16 mismatch vs reference"

    print("KERNEL_OK")
</pallas_src>

<mosaic_0001>
module attributes {stable_mosaic.version = 11 : i64} {
  func.func @_mlp_kernel(%arg0: i32, %arg1: memref<16x32xf32, #tpu.memory_space<vmem>>, %arg2: memref<32x64xf32, #tpu.memory_space<vmem>>, %arg3: memref<1x64xf32, #tpu.memory_space<vmem>>, %arg4: memref<64x32xf32, #tpu.memory_space<vmem>>, %arg5: memref<1x32xf32, #tpu.memory_space<vmem>>, %arg6: memref<16x32xf32, #tpu.memory_space<vmem>>) attributes {dimension_semantics = [#tpu.dimension_semantics<parallel>], iteration_bounds = array<i64: 1>, scalar_prefetch = 0 : i64, scratch_operands = 0 : i64, tpu.core_type = #tpu.core_type<tc>, window_params = [{transform_indices = @transform_0, window_bounds = array<i64: 16, 32>}, {pipeline_mode = #tpu.pipeline_mode<synchronous>, transform_indices = @transform_1, window_bounds = array<i64: 32, 64>}, {pipeline_mode = #tpu.pipeline_mode<synchronous>, transform_indices = @transform_2, window_bounds = array<i64: 1, 64>}, {pipeline_mode = #tpu.pipeline_mode<synchronous>, transform_indices = @transform_3, window_bounds = array<i64: 64, 32>}, {pipeline_mode = #tpu.pipeline_mode<synchronous>, transform_indices = @transform_4, window_bounds = array<i64: 1, 32>}, {transform_indices = @transform_5, window_bounds = array<i64: 16, 32>}]} {
    %c0 = arith.constant 0 : index
    %c0_0 = arith.constant 0 : index
    %0 = vector.load %arg1[%c0, %c0_0] : memref<16x32xf32, #tpu.memory_space<vmem>>, vector<16x32xf32>
    %c0_1 = arith.constant 0 : index
    %c0_2 = arith.constant 0 : index
    %1 = vector.load %arg2[%c0_1, %c0_2] : memref<32x64xf32, #tpu.memory_space<vmem>>, vector<32x64xf32>
    %cst = arith.constant dense<0.000000e+00> : vector<16x64xf32>
    %2 = tpu.matmul %0, %1, %cst {dimension_numbers = #tpu.dot_dimension_numbers<[1], [0], [0], [1], [0, 0, 1, 1], [], []>} : vector<16x32xf32>, vector<32x64xf32>, vector<16x64xf32> -> vector<16x64xf32>
    %c0_3 = arith.constant 0 : index
    %c0_4 = arith.constant 0 : index
    %3 = vector.load %arg3[%c0_3, %c0_4] : memref<1x64xf32, #tpu.memory_space<vmem>>, vector<1x64xf32>
    %4 = vector.broadcast %3 : vector<1x64xf32> to vector<16x64xf32>
    %5 = arith.addf %2, %4 : vector<16x64xf32>
    %cst_5 = arith.constant 5.000000e-01 : f32
    %6 = vector.broadcast %cst_5 : f32 to vector<16x64xf32>
    %7 = arith.mulf %6, %5 : vector<16x64xf32>
    %cst_6 = arith.constant 0.707106769 : f32
    %8 = vector.broadcast %cst_6 : f32 to vector<16x64xf32>
    %9 = arith.mulf %5, %8 : vector<16x64xf32>
    %10 = math.erf %9 : vector<16x64xf32>
    %cst_7 = arith.constant 1.000000e+00 : f32
    %11 = vector.broadcast %cst_7 : f32 to vector<16x64xf32>
    %12 = arith.addf %11, %10 : vector<16x64xf32>
    %13 = arith.mulf %7, %12 : vector<16x64xf32>
    %c0_8 = arith.constant 0 : index
    %c0_9 = arith.constant 0 : index
    %14 = vector.load %arg4[%c0_8, %c0_9] : memref<64x32xf32, #tpu.memory_space<vmem>>, vector<64x32xf32>
    %cst_10 = arith.constant dense<0.000000e+00> : vector<16x32xf32>
    %15 = tpu.matmul %13, %14, %cst_10 {dimension_numbers = #tpu.dot_dimension_numbers<[1], [0], [0], [1], [0, 0, 1, 1], [], []>} : vector<16x64xf32>, vector<64x32xf32>, vector<16x32xf32> -> vector<16x32xf32>
    %c0_11 = arith.constant 0 : index
    %c0_12 = arith.constant 0 : index
    %16 = vector.load %arg5[%c0_11, %c0_12] : memref<1x32xf32, #tpu.memory_space<vmem>>, vector<1x32xf32>
    %17 = vector.broadcast %16 : vector<1x32xf32> to vector<16x32xf32>
    %18 = arith.addf %15, %17 : vector<16x32xf32>
    %c0_13 = arith.constant 0 : index
    %c0_14 = arith.constant 0 : index
    %19 = vector.load %arg6[%c0_13, %c0_14] : memref<16x32xf32, #tpu.memory_space<vmem>>, vector<16x32xf32>
    tpu.vector_store %arg6[%c0_13, %c0_14], %18 {strides = array<i32>} : memref<16x32xf32, #tpu.memory_space<vmem>>, vector<16x32xf32>,
    return
  }
  func.func @transform_0(%arg0: i32) -> (i32, i32) {
    %c0_i32 = arith.constant 0 : i32
    %c0_i32_0 = arith.constant 0 : i32
    return %arg0, %c0_i32 : i32, i32
  }
  func.func @transform_1(%arg0: i32) -> (i32, i32) {
    %c0_i32 = arith.constant 0 : i32
    %c0_i32_0 = arith.constant 0 : i32
    %c0_i32_1 = arith.constant 0 : i32
    return %c0_i32, %c0_i32_0 : i32, i32
  }
  func.func @transform_2(%arg0: i32) -> (i32, i32) {
    %c0_i32 = arith.constant 0 : i32
    %c0_i32_0 = arith.constant 0 : i32
    %c0_i32_1 = arith.constant 0 : i32
    return %c0_i32, %c0_i32_0 : i32, i32
  }
  func.func @transform_3(%arg0: i32) -> (i32, i32) {
    %c0_i32 = arith.constant 0 : i32
    %c0_i32_0 = arith.constant 0 : i32
    %c0_i32_1 = arith.constant 0 : i32
    return %c0_i32, %c0_i32_0 : i32, i32
  }
  func.func @transform_4(%arg0: i32) -> (i32, i32) {
    %c0_i32 = arith.constant 0 : i32
    %c0_i32_0 = arith.constant 0 : i32
    %c0_i32_1 = arith.constant 0 : i32
    return %c0_i32, %c0_i32_0 : i32, i32
  }
  func.func @transform_5(%arg0: i32) -> (i32, i32) {
    %c0_i32 = arith.constant 0 : i32
    %c0_i32_0 = arith.constant 0 : i32
    return %arg0, %c0_i32 : i32, i32
  }
}

</mosaic_0001>

<llo_original>
// kernel: mlp_pallas.1
$region0: #{mlp_pallas.1}
  #allocation0 [shape = 'u32[]', space=smem, size = 0x4, offset = 0x4, fixed_abs, tag = 'smem constant byte address 0x4 - core index']
  #allocation1 [shape = 'u32[144,128]{1,0:T(1,128)}', space=vmem, size = 0x12000, scoped, tag = 'internal scratch']
  %s0 = inlined_call_operand.vmem [shape: f32[16,32], index: 0, kind: input, shape index: {}]
  %s1 = inlined_call_operand.vmem [shape: f32[32,64], index: 1, kind: input, shape index: {}]
  %s2 = inlined_call_operand.vmem [shape: f32[1,64], index: 2, kind: input, shape index: {}]
  %s3 = inlined_call_operand.vmem [shape: f32[64,32], index: 3, kind: input, shape index: {}]
  %s4 = inlined_call_operand.vmem [shape: f32[1,32], index: 4, kind: input, shape index: {}]
  %s5 = inlined_call_operand.hbm [shape: f32[16,32], index: 5, kind: output, shape index: {}]
  %s6 = sld [smem:[#allocation0]]
  $region30: #{mlp_pallas.1} parent=0
    _
  %s8 = ssub.s32 1, %s6
  %s9 = scalar_select 0, %s8, %s6
  $region1: #{mlp_pallas.1} parent=0
    #allocation2 [shape = 'u8[8192]{0}', space=vmem, size = 0x2000, scoped, tag = 'output window, operand 0, single buffered']
    #allocation3 [shape = 's32[1]{0}', space=sflag, size = 0x4, scoped, tag = 'scoped memory for mlp_pallas.1']
    %10 = vsyncpa [#allocation3], 0
    // Predicated region
    $region2: #{mlp_pallas.1} parent=1 // pred_check
      _
    $region3: #{mlp_pallas.1} parent=1 // pred_check_branch
      %12 = sbr.rel (0) target = $region5
    $region4: #{mlp_pallas.1} parent=1 // pred_region
      _
    $region5: #{mlp_pallas.1} parent=1 // pred_fallthru
      _
    // Predicated region
    $region6: #{mlp_pallas.1} parent=1 // pred_check
      _
    $region7: #{mlp_pallas.1} parent=1 // pred_check_branch
      %14 = sbr.rel (0) target = $region9
    $region8: #{mlp_pallas.1} parent=1 // pred_region
      _
    $region9: #{mlp_pallas.1} parent=1 // pred_fallthru
      _
    // Predicated region
    $region10: #{mlp_pallas.1} parent=1 // pred_check
      _
    $region11: #{mlp_pallas.1} parent=1 // pred_check_branch
      %16 = sbr.rel (0) target = $region13
    $region12: #{mlp_pallas.1} parent=1 // pred_region
      _
    $region13: #{mlp_pallas.1} parent=1 // pred_fallthru
      _
    // Predicated region
    $region14: #{mlp_pallas.1} parent=1 // pred_check
      _
    $region15: #{mlp_pallas.1} parent=1 // pred_check_branch
      %18 = sbr.rel (0) target = $region17
    $region16: #{mlp_pallas.1} parent=1 // pred_region
      _
    $region17: #{mlp_pallas.1} parent=1 // pred_fallthru
      _
    // Predicated region
    $region18: #{mlp_pallas.1} parent=1 // pred_check
      _
    $region19: #{mlp_pallas.1} parent=1 // pred_check_branch
      %20 = sbr.rel (0) target = $region21
    $region20: #{mlp_pallas.1} parent=1 // pred_region
      _
    $region21: #{mlp_pallas.1} parent=1 // pred_fallthru
      _
    %v21 = vld [vmem:[%s0] sm:$0xff]
    %v22 = vld [vmem:[%s0 + $0x8] sm:$0xff]
    %v23 = vld [vmem:[%s1] sm:$0xff]
    %v24 = vld [vmem:[%s1 + $0x8] sm:$0xff]
    %v25 = vld [vmem:[%s1 + $0x10] sm:$0xff]
    %v26 = vld [vmem:[%s1 + $0x18] sm:$0xff]
    %v27 = vld [vmem:[%s2] sm:$0x1]
    %v29 = vlaneseq
    %v30 = vshrl.u32 %v29, 7
    %v31 = vsub.s32 0, %v30
    %v32 = vrot.slane %v27, %v31
    %vm34 = vcmask 261120
    %v36 = vsel %vm34, %v21, 0
    %v39 = vsel %vm34, %v22, 0
    %41 = vmatprep.subr.mxu0 0.0
    %42 = vmatpush1.msra.mxu0 0.0
    %43 = vmatprep.subr.mxu0 0.0
    %44 = vmatpush1.msra.mxu0 0.0
    %45 = vmatprep.subr.mxu0 0.0
    %46 = vmatpush1.msra.mxu0 0.0
    %47 = vmatprep.subr.mxu0 0.0
    %48 = vmatpush1.msra.mxu0 0.0
    %49 = vmatprep.subr.mxu0 0.0
    %50 = vmatpush1.msra.mxu0 0.0
    %51 = vmatprep.subr.mxu0 0.0
    %52 = vmatpush1.msra.mxu0 0.0
    %53 = vmatprep.subr.mxu0 0.0
    %54 = vmatpush1.msra.mxu0 0.0
    %55 = vmatprep.subr.mxu0 0.0
    %56 = vmatpush1.msra.mxu0 0.0
    %57 = vmatprep.subr.mxu0 0.0
    %58 = vmatpush1.msra.mxu0 0.0
    %59 = vmatprep.subr.mxu0 0.0
    %60 = vmatpush1.msra.mxu0 0.0
    %61 = vmatprep.subr.mxu0 0.0
    %62 = vmatpush1.msra.mxu0 0.0
    %63 = vmatprep.subr.mxu0 0.0
    %64 = vmatpush1.msra.mxu0 0.0
    %65 = vmatprep.subr.mxu0 0.0
    %66 = vmatpush1.msra.mxu0 %v26
    %67 = vmatprep.subr.mxu0 0.0
    %68 = vmatpush1.msra.mxu0 %v25
    %69 = vmatprep.subr.mxu0 0.0
    %70 = vmatpush1.msra.mxu0 %v24
    %71 = vmatprep.subr.mxu0 0.0
    %72 = vmatpush1.msra.mxu0 %v23
    %73 = vmatprep.subr.mxu0 0.0
    %74 = vmatpush2.msra.mxu0 0.0
    %75 = vmatprep.subr.mxu0 0.0
    %76 = vmatpush2.msra.mxu0 0.0
    %77 = vmatprep.subr.mxu0 0.0
    %78 = vmatpush2.msra.mxu0 0.0
    %79 = vmatprep.subr.mxu0 0.0
    %80 = vmatpush2.msra.mxu0 0.0
    %81 = vmatprep.subr.mxu0 0.0
    %82 = vmatpush2.msra.mxu0 0.0
    %83 = vmatprep.subr.mxu0 0.0
    %84 = vmatpush2.msra.mxu0 0.0
    %85 = vmatprep.subr.mxu0 0.0
    %86 = vmatpush2.msra.mxu0 0.0
    %87 = vmatprep.subr.mxu0 0.0
    %88 = vmatpush2.msra.mxu0 0.0
    %89 = vmatprep.subr.mxu0 0.0
    %90 = vmatpush2.msra.mxu0 0.0
    %91 = vmatprep.subr.mxu0 0.0
    %92 = vmatpush2.msra.mxu0 0.0
    %93 = vmatprep.subr.mxu0 0.0
    %94 = vmatpush2.msra.mxu0 0.0
    %95 = vmatprep.subr.mxu0 0.0
    %96 = vmatpush2.msra.mxu0 0.0
    %97 = vmatprep.subr.mxu0 0.0
    %98 = vmatpush2.msra.mxu0 0.0
    %99 = vmatprep.subr.mxu0 0.0
    %100 = vmatpush2.msra.mxu0 0.0
    %101 = vmatprep.subr.mxu0 0.0
    %102 = vmatpush2.msra.mxu0 0.0
    %103 = vmatprep.subr.mxu0 0.0
    %104 = vmatpush2.msra.mxu0 0.0
    %105 = vmatprep.mubr.f32.mxu0 0.0
    %106 = vmatmul.mubr.f32.gmra.mxu0 %v36
    %v107 = vpop.f32.mrf.mxu0
    %v108 = vadd.f32 %v32, %v107
    %v109 = vpop.f32.mrf.mxu0
    %110 = vmatprep.mubr.f32.mxu0 0.0
    %111 = vmatmul.mubr.f32.gmra.mxu0 %v39
    %v112 = vpop.f32.mrf.mxu0
    %v113 = vadd.f32 %v32, %v112
    %v114 = vpop.f32.mrf.mxu0
    %115 = vdwg.mxu0
    %v116 = vmul.f32 %v108, 0.5
    %v117 = vmul.f32 %v113, 0.5
    %v118 = vmul.f32 %v108, 0.70710677
    %v119 = vmul.f32 %v113, 0.70710677
    %v120 = verf.f32.pop %v118
    %v121 = verf.f32.pop %v119
    %v122 = vadd.f32 %v120, 1.0
    %v123 = vadd.f32 %v121, 1.0
    %v124 = vmul.f32 %v116, %v122
    %v125 = vmul.f32 %v117, %v123
    %v126 = vld [vmem:[%s3] sm:$0xff]
    %v127 = vld [vmem:[%s3 + $0x8] sm:$0xff]
    %v128 = vld [vmem:[%s3 + $0x10] sm:$0xff]
    %v129 = vld [vmem:[%s3 + $0x18] sm:$0xff]
    %v130 = vld [vmem:[%s3 + $0x20] sm:$0xff]
    %v131 = vld [vmem:[%s3 + $0x28] sm:$0xff]
    %v132 = vld [vmem:[%s3 + $0x30] sm:$0xff]
    %v133 = vld [vmem:[%s3 + $0x38] sm:$0xff]
    %v134 = vld [vmem:[%s4] sm:$0x1]
    %v136 = vlaneseq
    %v137 = vshrl.u32 %v136, 7
    %v138 = vsub.s32 0, %v137
    %v139 = vrot.slane %v134, %v138
    %vm141 = vcmask 523264
    %v143 = vsel %vm141, %v124, 0
    %v146 = vsel %vm141, %v125, 0
    %148 = vmatprep.subr.mxu0 0.0
    %149 = vmatpush1.msra.mxu0 0.0
    %150 = vmatprep.subr.mxu0 0.0
    %151 = vmatpush1.msra.mxu0 0.0
    %152 = vmatprep.subr.mxu0 0.0
    %153 = vmatpush1.msra.mxu0 0.0
    %154 = vmatprep.subr.mxu0 0.0
    %155 = vmatpush1.msra.mxu0 0.0
    %156 = vmatprep.subr.mxu0 0.0
    %157 = vmatpush1.msra.mxu0 0.0
    %158 = vmatprep.subr.mxu0 0.0
    %159 = vmatpush1.msra.mxu0 0.0
    %160 = vmatprep.subr.mxu0 0.0
    %161 = vmatpush1.msra.mxu0 0.0
    %162 = vmatprep.subr.mxu0 0.0
    %163 = vmatpush1.msra.mxu0 0.0
    %164 = vmatprep.subr.mxu0 0.0
    %165 = vmatpush1.msra.mxu0 %v133
    %166 = vmatprep.subr.mxu0 0.0
    %167 = vmatpush1.msra.mxu0 %v132
    %168 = vmatprep.subr.mxu0 0.0
    %169 = vmatpush1.msra.mxu0 %v131
    %170 = vmatprep.subr.mxu0 0.0
    %171 = vmatpush1.msra.mxu0 %v130
    %172 = vmatprep.subr.mxu0 0.0
    %173 = vmatpush1.msra.mxu0 %v129
    %174 = vmatprep.subr.mxu0 0.0
    %175 = vmatpush1.msra.mxu0 %v128
    %176 = vmatprep.subr.mxu0 0.0
    %177 = vmatpush1.msra.mxu0 %v127
    %178 = vmatprep.subr.mxu0 0.0
    %179 = vmatpush1.msra.mxu0 %v126
    %180 = vmatprep.subr.mxu0 0.0
    %181 = vmatpush2.msra.mxu0 0.0
    %182 = vmatprep.subr.mxu0 0.0
    %183 = vmatpush2.msra.mxu0 0.0
    %184 = vmatprep.subr.mxu0 0.0
    %185 = vmatpush2.msra.mxu0 0.0
    %186 = vmatprep.subr.mxu0 0.0
    %187 = vmatpush2.msra.mxu0 0.0
    %188 = vmatprep.subr.mxu0 0.0
    %189 = vmatpush2.msra.mxu0 0.0
    %190 = vmatprep.subr.mxu0 0.0
    %191 = vmatpush2.msra.mxu0 0.0
    %192 = vmatprep.subr.mxu0 0.0
    %193 = vmatpush2.msra.mxu0 0.0
    %194 = vmatprep.subr.mxu0 0.0
    %195 = vmatpush2.msra.mxu0 0.0
    %196 = vmatprep.subr.mxu0 0.0
    %197 = vmatpush2.msra.mxu0 0.0
    %198 = vmatprep.subr.mxu0 0.0
    %199 = vmatpush2.msra.mxu0 0.0
    %200 = vmatprep.subr.mxu0 0.0
    %201 = vmatpush2.msra.mxu0 0.0
    %202 = vmatprep.subr.mxu0 0.0
    %203 = vmatpush2.msra.mxu0 0.0
    %204 = vmatprep.subr.mxu0 0.0
    %205 = vmatpush2.msra.mxu0 0.0
    %206 = vmatprep.subr.mxu0 0.0
    %207 = vmatpush2.msra.mxu0 0.0
    %208 = vmatprep.subr.mxu0 0.0
    %209 = vmatpush2.msra.mxu0 0.0
    %210 = vmatprep.subr.mxu0 0.0
    %211 = vmatpush2.msra.mxu0 0.0
    %212 = vmatprep.mubr.f32.mxu0 0.0
    %213 = vmatmul.mubr.f32.gmra.mxu0 %v143
    %v214 = vpop.f32.mrf.mxu0
    %v215 = vadd.f32 %v139, %v214
    %v216 = vpop.f32.mrf.mxu0
    %217 = vmatprep.mubr.f32.mxu0 0.0
    %218 = vmatmul.mubr.f32.gmra.mxu0 %v146
    %v219 = vpop.f32.mrf.mxu0
    %v220 = vadd.f32 %v139, %v219
    %v221 = vpop.f32.mrf.mxu0
    %222 = vdwg.mxu0
    %223 = vst.msk [vmem:[#allocation2] sm:$0xff] %vm34, %v215
    %224 = vst.msk [vmem:[#allocation2 + $0x8] sm:$0xff] %vm34, %v220
    // Predicated region
    $region22: #{mlp_pallas.1} parent=1 // pred_check
      _
    $region23: #{mlp_pallas.1} parent=1 // pred_check_branch
      %226 = sbr.rel (0) target = $region25
    $region24: #{mlp_pallas.1} parent=1 // pred_region
      %s228 = ssub.s32 256, 256
      %229 = vsyncadd [#allocation3], %s228
      %s230 = sshll.u32 [#allocation2], 4
      %s231 = int_to_ptr.vmem [resolvable:$true] %s230
      %236 = dma.vmem_to_hbm [thread:$0]  %s231, 256, %s5, [#allocation3], 128, 128, 8
    $region25: #{mlp_pallas.1} parent=1 // pred_fallthru
      _
    // Predicated region
    $region26: #{mlp_pallas.1} parent=1 // pred_check
      _
    $region27: #{mlp_pallas.1} parent=1 // pred_check_branch
      %238 = sbr.rel (0) target = $region29
    $region28: #{mlp_pallas.1} parent=1 // pred_region
      %239 = dma.done [#allocation3], 256
    $region29: #{mlp_pallas.1} parent=1 // pred_fallthru
      _
    %240 = vsyncpa [#allocation3], 1

</llo_original>
